<compile_context>
chip_gen: v5e
topology: v5e:2x2
jax: 0.10.0
libtpu: 0.0.40
codegen_flags: <defaults>
</compile_context>

<pallas_src>
import functools
from collections import namedtuple

import jax
import jax.numpy as jnp
from jax.experimental import pallas as pl
from jax.experimental.pallas import tpu as pltpu

LANE = 128
DEFAULT_TILE_M = 512                   # amortizes per-grid-step overhead
VMEM_LIMIT = 32 * 1024 * 1024          # safe on v5e/v6e (128 MiB) and v7x (64 MiB)


def _round_up(x, m):
    return ((x + m - 1) // m) * m


# ----------------------------------------------------------------------------
# Pallas kernels
# ----------------------------------------------------------------------------
def _conv_matmul_kernel(a_ref, w_ref, b_ref, o_ref, sum_ref=None, sq_ref=None,
                        *, epilogue, slope, tile_m, real_m, emit_stats):
    """Single-K-block MXU matmul with fused bias + optional LeakyReLU epilogue
    and optional per-M-tile BatchNorm partial stats (masked padded rows)."""
    y = jnp.dot(a_ref[...], w_ref[...], preferred_element_type=jnp.float32)
    y = y + b_ref[...]
    if epilogue == "lrelu":
        y = jnp.where(y >= 0.0, y, slope * y)
    if emit_stats:
        i = pl.program_id(0)
        row = i * tile_m + jax.lax.broadcasted_iota(jnp.int32, y.shape, 0)
        ym = jnp.where(row < real_m, y, 0.0)                 # mask padded rows
        oc = y.shape[1]
        ym_r = ym.reshape(tile_m // 8, 8, oc)                # sublane-group partials
        sum_ref[...] = jnp.sum(ym_r, axis=0)[None]           # (1, 8, oc)
        sq_ref[...] = jnp.sum(ym_r * ym_r, axis=0)[None]     # (1, 8, oc)
    o_ref[...] = y.astype(o_ref.dtype)


def _scale_shift_lrelu_kernel(x_ref, s_ref, t_ref, o_ref, *, slope):
    y = x_ref[...].astype(jnp.float32) * s_ref[...] + t_ref[...]
    o_ref[...] = jnp.where(y >= 0.0, y, slope * y).astype(o_ref.dtype)


def _abs_diff_partial_kernel(x_ref, y_ref, o_ref, *, tile_r):
    d = jnp.abs(x_ref[...].astype(jnp.float32) - y_ref[...].astype(jnp.float32))
    part = jnp.sum(d.reshape(tile_r // 8, 8, d.shape[-1]), axis=0)   # (8, LANE)
    o_ref[...] = part[None]


def _lpips_dist_kernel(fx_ref, fy_ref, w_ref, o_ref, *, tile_s):
    # Channel-unit-normalize, squared diff, 1x1 "lin" weights; per-tile partial
    # reduce to an (b, 8, c) slab (padded spatial rows are zero -> contribute 0).
    fx = fx_ref[...].astype(jnp.float32)
    fy = fy_ref[...].astype(jnp.float32)
    nx = fx * jax.lax.rsqrt(jnp.sum(fx * fx, axis=-1, keepdims=True) + 1e-10)
    ny = fy * jax.lax.rsqrt(jnp.sum(fy * fy, axis=-1, keepdims=True) + 1e-10)
    d = w_ref[...] * (nx - ny) ** 2                          # (b, tile_s, c)
    b, _, c = d.shape
    part = jnp.sum(d.reshape(b, tile_s // 8, 8, c), axis=1)  # (b, 8, c)
    o_ref[...] = part[None]


def _hinge_d_loss_kernel(r_ref, f_ref, o_ref):
    lr = jnp.mean(jnp.maximum(1.0 - r_ref[...], 0.0), keepdims=True)
    lf = jnp.mean(jnp.maximum(1.0 + f_ref[...], 0.0), keepdims=True)
    o_ref[...] = 0.5 * (lr + lf)


def _non_sat_gen_loss_kernel(f_ref, o_ref):
    # Matches reference: mean logits per sample FIRST, then sigmoid-CE(labels=1).
    z = jnp.mean(f_ref[...], axis=-1, keepdims=True)         # [B, 1]
    ce = jnp.maximum(z, 0.0) - z + jnp.log1p(jnp.exp(-jnp.abs(z)))
    o_ref[...] = jnp.mean(ce, keepdims=True)


# ----------------------------------------------------------------------------
# pallas_call wrappers
# ----------------------------------------------------------------------------
def pallas_conv_matmul(a_bf16, w_bf16, bias_f32, *, tile_m, real_m,
                       epilogue="none", slope=0.2, out_dtype=jnp.bfloat16,
                       emit_stats=False):
    m_pad, k_pad = a_bf16.shape
    oc_pad = w_bf16.shape[1]
    n_tiles = m_pad // tile_m
    kernel = functools.partial(_conv_matmul_kernel, epilogue=epilogue,
                               slope=slope, tile_m=tile_m, real_m=real_m,
                               emit_stats=emit_stats)
    in_specs = [pl.BlockSpec((tile_m, k_pad), lambda i: (i, 0)),
                pl.BlockSpec((k_pad, oc_pad), lambda i: (0, 0)),   # resident W
                pl.BlockSpec((1, oc_pad), lambda i: (0, 0))]
    o_sds = jax.ShapeDtypeStruct((m_pad, oc_pad), out_dtype)
    o_spec = pl.BlockSpec((tile_m, oc_pad), lambda i: (i, 0))
    if emit_stats:
        st_sds = jax.ShapeDtypeStruct((n_tiles, 8, oc_pad), jnp.float32)
        st_spec = pl.BlockSpec((1, 8, oc_pad), lambda i: (i, 0, 0))
        out_shape, out_specs = (o_sds, st_sds, st_sds), (o_spec, st_spec, st_spec)
    else:
        out_shape, out_specs = o_sds, o_spec
    res = pl.pallas_call(
        kernel, out_shape=out_shape, grid=(n_tiles,),
        in_specs=in_specs, out_specs=out_specs,
        compiler_params=pltpu.CompilerParams(
            dimension_semantics=("parallel",),
            vmem_limit_bytes=VMEM_LIMIT),
    )(a_bf16, w_bf16, bias_f32)
    if emit_stats:
        return res[0], (res[1], res[2])
    return res, None


def pallas_scale_shift_lrelu(x_pad, scale_row, shift_row, *, slope, tile_m,
                             out_dtype=jnp.bfloat16):
    m_pad, c = x_pad.shape
    return pl.pallas_call(
        functools.partial(_scale_shift_lrelu_kernel, slope=slope),
        out_shape=jax.ShapeDtypeStruct((m_pad, c), out_dtype),
        grid=(m_pad // tile_m,),
        in_specs=[pl.BlockSpec((tile_m, c), lambda i: (i, 0)),
                  pl.BlockSpec((1, c), lambda i: (0, 0)),
                  pl.BlockSpec((1, c), lambda i: (0, 0))],
        out_specs=pl.BlockSpec((tile_m, c), lambda i: (i, 0)),
        compiler_params=pltpu.CompilerParams(
            dimension_semantics=("parallel",), vmem_limit_bytes=VMEM_LIMIT),
    )(x_pad, scale_row, shift_row)


def pallas_abs_diff_sum(x, y):
    total = int(x.size)
    rows = (total + LANE - 1) // LANE
    tile_r = min(2048, _round_up(rows, 8))
    rows_pad = _round_up(rows, tile_r)
    n_pad = rows_pad * LANE
    xf = jnp.pad(x.reshape(-1).astype(jnp.float32),
                 (0, n_pad - total)).reshape(rows_pad, LANE)
    yf = jnp.pad(y.reshape(-1).astype(jnp.float32),
                 (0, n_pad - total)).reshape(rows_pad, LANE)
    n_tiles = rows_pad // tile_r
    parts = pl.pallas_call(
        functools.partial(_abs_diff_partial_kernel, tile_r=tile_r),
        out_shape=jax.ShapeDtypeStruct((n_tiles, 8, LANE), jnp.float32),
        grid=(n_tiles,),
        in_specs=[pl.BlockSpec((tile_r, LANE), lambda i: (i, 0)),
                  pl.BlockSpec((tile_r, LANE), lambda i: (i, 0))],
        out_specs=pl.BlockSpec((1, 8, LANE), lambda i: (i, 0, 0)),
        compiler_params=pltpu.CompilerParams(
            dimension_semantics=("parallel",), vmem_limit_bytes=VMEM_LIMIT),
    )(xf, yf)
    return jnp.sum(parts)


def pallas_lpips_dist(fx3, fy3, lin_row, real_s, tile_s):
    b, s_pad, c = fx3.shape
    n_tiles = s_pad // tile_s
    out = pl.pallas_call(
        functools.partial(_lpips_dist_kernel, tile_s=tile_s),
        out_shape=jax.ShapeDtypeStruct((n_tiles, b, 8, c), jnp.float32),
        grid=(n_tiles,),
        in_specs=[pl.BlockSpec((b, tile_s, c), lambda i: (0, i, 0)),
                  pl.BlockSpec((b, tile_s, c), lambda i: (0, i, 0)),
                  pl.BlockSpec((1, 1, c), lambda i: (0, 0, 0))],
        out_specs=pl.BlockSpec((1, b, 8, c), lambda i: (i, 0, 0, 0)),
        compiler_params=pltpu.CompilerParams(
            dimension_semantics=("parallel",), vmem_limit_bytes=VMEM_LIMIT),
    )(fx3, fy3, lin_row)
    return jnp.sum(out, axis=(0, 2, 3)) / real_s             # [B]


def pallas_hinge_d_loss(logits_real, logits_fake):
    r = logits_real.reshape(1, -1).astype(jnp.float32)
    f = logits_fake.reshape(1, -1).astype(jnp.float32)
    out = pl.pallas_call(
        _hinge_d_loss_kernel,
        out_shape=jax.ShapeDtypeStruct((1, 1), jnp.float32),
        grid=(1,),
        in_specs=[pl.BlockSpec(r.shape, lambda i: (0, 0)),
                  pl.BlockSpec(f.shape, lambda i: (0, 0))],
        out_specs=pl.BlockSpec((1, 1), lambda i: (0, 0)),
    )(r, f)
    return out[0, 0]


def pallas_non_sat_gen_loss(logits_fake_nhwc):
    b = logits_fake_nhwc.shape[0]
    f = logits_fake_nhwc.reshape(b, -1).astype(jnp.float32)
    out = pl.pallas_call(
        _non_sat_gen_loss_kernel,
        out_shape=jax.ShapeDtypeStruct((1, 1), jnp.float32),
        grid=(1,),
        in_specs=[pl.BlockSpec(f.shape, lambda i: (0, 0))],
        out_specs=pl.BlockSpec((1, 1), lambda i: (0, 0)),
    )(f)
    return out[0, 0]


# ----------------------------------------------------------------------------
# conv2d = NHWC bf16 im2col (glue) + single-K-block Pallas MXU matmul
# ----------------------------------------------------------------------------
def conv2d_nhwc(x_nhwc, w_mat, bias_row, kh, kw, stride, pad, *,
                epilogue="none", slope=0.2, out_dtype=jnp.bfloat16,
                emit_stats=False):
    """x: [N,H,W,C] (real channels); w_mat: [K_pad, OC_pad] bf16; bias: [1,OC_pad].
    Returns (out_pad [M_pad, OC_pad], stats-or-None, (N, OH, OW, M, tile_m))."""
    n, h, w, c = x_nhwc.shape
    xp = jnp.pad(x_nhwc.astype(jnp.bfloat16),            # bf16 BEFORE im2col
                 ((0, 0), (pad, pad), (pad, pad), (0, 0)))
    hp, wp = h + 2 * pad, w + 2 * pad
    oh = (hp - kh) // stride + 1
    ow = (wp - kw) // stride + 1
    taps = []
    for i in range(kh):
        for j in range(kw):
            taps.append(xp[:, i:i + stride * (oh - 1) + 1:stride,
                           j:j + stride * (ow - 1) + 1:stride, :])
    # TODO(synk): move this im2col into the matmul kernel (per-tile tap DMA) to
    #             avoid the HBM patch blow-up at production image sizes.
    patches = jnp.concatenate(taps, axis=-1)              # [N,OH,OW,C*KH*KW]
    m = n * oh * ow
    k = c * kh * kw
    k_pad = w_mat.shape[0]
    tile_m = min(DEFAULT_TILE_M, _round_up(m, 8))
    m_pad = _round_up(m, tile_m)
    a = jnp.pad(patches.reshape(m, k), ((0, m_pad - m), (0, k_pad - k)))
    out_pad, stats = pallas_conv_matmul(a, w_mat, bias_row, tile_m=tile_m,
                                        real_m=m, epilogue=epilogue,
                                        slope=slope, out_dtype=out_dtype,
                                        emit_stats=emit_stats)
    return out_pad, stats, (n, oh, ow, m, tile_m)


def _pack_conv_weight(w_oihw, oc_pad):
    """[OC,IC,KH,KW] -> [round128(KH*KW*IC), oc_pad] bf16 in im2col ordering."""
    oc, ic, kh, kw = w_oihw.shape
    w_hwio = jnp.transpose(w_oihw, (2, 3, 1, 0))           # [KH,KW,IC,OC]
    w_full = jnp.zeros((kh, kw, ic, oc_pad), jnp.float32).at[..., :oc].set(w_hwio)
    k = kh * kw * ic
    k_pad = _round_up(k, LANE)
    wmat = jnp.pad(w_full.reshape(k, oc_pad), ((0, k_pad - k), (0, 0)))
    return wmat.astype(jnp.bfloat16)


# ----------------------------------------------------------------------------
# Module
# ----------------------------------------------------------------------------
def adopt_weight(weight, global_step, threshold=0, value=0.0):
    # NOTE: global_step must be a static Python int (the reference is eager).
    if global_step < threshold:
        weight = value
    return weight


LossBreak = namedtuple("LossBreak",
                       ["commitment", "per_sample_entropy", "codebook_entropy"])


class VQLPIPSWithDiscriminatorPallas:
    def __init__(self, key, disc_start, disc_loss="hinge", disc_dim=32,
                 disc_num_layers=2, disc_in_channels=3, disc_factor=1.0,
                 disc_weight=1.0, gen_adv_loss="non_saturate",
                 perceptual_weight=1.0, commit_weight=0.25, codebook_weight=1.0,
                 codebook_enlarge_ratio=3, codebook_enlarge_steps=2000,
                 gen_loss_weight=0.1, cls_loss_weight=0.0):
        assert disc_loss == "hinge" and gen_adv_loss == "non_saturate"
        self.discriminator_iter_start = disc_start
        self.disc_factor = disc_factor
        self.discriminator_weight = disc_weight
        self.disc_conditional = False
        self.perceptual_weight = perceptual_weight
        self.commit_weight = commit_weight
        self.codebook_weight = codebook_weight
        self.codebook_enlarge_ratio = codebook_enlarge_ratio
        self.codebook_enlarge_steps = codebook_enlarge_steps
        self.gen_loss_weight = gen_loss_weight
        self.cls_loss_weight = cls_loss_weight
        self.training = True

        keys = jax.random.split(key, 16)
        ki = iter(range(16))

        # ---- PatchGAN (NLayerDiscriminator) params, weights_init: N(0, 0.02)
        ndf = disc_dim
        cfgs = [dict(ic=disc_in_channels, oc=ndf, stride=2, bn=False)]
        nf_mult = 1
        for ln in range(1, disc_num_layers):
            nf_mult_prev, nf_mult = nf_mult, min(2 ** ln, 8)
            cfgs.append(dict(ic=ndf * nf_mult_prev, oc=ndf * nf_mult,
                             stride=2, bn=True))
        nf_mult_prev, nf_mult = nf_mult, min(2 ** disc_num_layers, 8)
        cfgs.append(dict(ic=ndf * nf_mult_prev, oc=ndf * nf_mult,
                         stride=1, bn=True))
        cfgs.append(dict(ic=ndf * nf_mult, oc=1, stride=1, bn=False))

        self.disc_layers = []
        for cfg in cfgs:
            oc, ic = cfg["oc"], cfg["ic"]
            oc_pad = _round_up(oc, LANE)
            w = 0.02 * jax.random.normal(keys[next(ki)], (oc, ic, 4, 4), jnp.float32)
            layer = dict(wmat=_pack_conv_weight(w, oc_pad),
                         brow=jnp.zeros((1, oc_pad), jnp.float32),
                         stride=cfg["stride"], bn=cfg["bn"], oc=oc)
            if cfg["bn"]:
                gamma = 1.0 + 0.02 * jax.random.normal(keys[next(ki)], (oc,), jnp.float32)
                layer["gamma_row"] = jnp.ones((1, oc_pad), jnp.float32).at[0, :oc].set(gamma)
                layer["beta_row"] = jnp.zeros((1, oc_pad), jnp.float32)
            self.disc_layers.append(layer)

        # ---- synthetic perceptual net (stands in for pretrained-VGG LPIPS)
        # TODO(synk): real LPIPS uses pretrained VGG16 features + learned lin
        # layers from a checkpoint; replaced by a deterministic 1-stage conv
        # feature extractor with the same normalize / diff^2 / lin structure.
        self.lpips_shift = jnp.array([-0.030, -0.088, -0.188], jnp.float32).reshape(1, 1, 1, 3)
        self.lpips_scale = jnp.array([0.458, 0.448, 0.450], jnp.float32).reshape(1, 1, 1, 3)
        lp_w = 0.1 * jax.random.normal(keys[next(ki)], (8, 3, 3, 3), jnp.float32)
        self.lpips_wmat = _pack_conv_weight(lp_w, LANE)
        self.lpips_brow = jnp.zeros((1, LANE), jnp.float32)
        lin = jnp.abs(0.1 * jax.random.normal(keys[next(ki)], (8,), jnp.float32))
        self.lpips_lin_row = jnp.zeros((1, 1, LANE), jnp.float32).at[0, 0, :8].set(lin)

    # --- PatchGAN discriminator (NHWC in / NHWC logits out) -----------------
    def discriminator(self, x_nhwc):
        h = x_nhwc
        n_layers = len(self.disc_layers)
        for li, layer in enumerate(self.disc_layers):
            is_last = li == n_layers - 1
            epilogue = "lrelu" if (not layer["bn"] and not is_last) else "none"
            out_dtype = jnp.float32 if is_last else jnp.bfloat16
            out_pad, stats, (n, oh, ow, m, tile_m) = conv2d_nhwc(
                h, layer["wmat"], layer["brow"], kh=4, kw=4,
                stride=layer["stride"], pad=1, epilogue=epilogue, slope=0.2,
                out_dtype=out_dtype, emit_stats=layer["bn"])
            if layer["bn"]:
                sum_parts, sq_parts = stats
                s_sum = jnp.sum(sum_parts, axis=(0, 1))       # (oc_pad,)
                s_sq = jnp.sum(sq_parts, axis=(0, 1))
                mean = s_sum / m
                # NOTE: single-pass E[x^2]-mean^2 variance (f32); clamped >= 0
                # to guard against cancellation for large-magnitude activations.
                var = jnp.maximum(s_sq / m - mean * mean, 0.0)
                scale = layer["gamma_row"] * jax.lax.rsqrt(var[None, :] + 1e-5)
                shift = layer["beta_row"] - mean[None, :] * scale
                out_pad = pallas_scale_shift_lrelu(out_pad, scale, shift,
                                                   slope=0.2, tile_m=tile_m,
                                                   out_dtype=jnp.bfloat16)
            oc = layer["oc"]
            h = out_pad[:m, :oc].reshape(n, oh, ow, oc)       # real channels only
        return h                                              # [N, H', W', 1] f32

    # --- perceptual loss (LPIPS-style, synthetic weights) -------------------
    def perceptual_loss_per_sample(self, x_nhwc, y_nhwc):
        n = x_nhwc.shape[0]
        xy = jnp.concatenate([x_nhwc, y_nhwc], axis=0)        # shared-weight batch
        xyn = (xy - self.lpips_shift) / self.lpips_scale
        feats_pad, _, (n2, oh, ow, m, _) = conv2d_nhwc(
            xyn, self.lpips_wmat, self.lpips_brow, kh=3, kw=3, stride=1, pad=1,
            epilogue="lrelu", slope=0.0, out_dtype=jnp.bfloat16)   # fused ReLU
        s = oh * ow
        c = feats_pad.shape[1]
        feats = feats_pad[:m].reshape(n2, s, c)
        tile_s = min(512, _round_up(s, 8))
        s_pad = _round_up(s, tile_s)
        fx3 = jnp.pad(feats[:n], ((0, 0), (0, s_pad - s), (0, 0)))
        fy3 = jnp.pad(feats[n:], ((0, 0), (0, s_pad - s), (0, 0)))
        return pallas_lpips_dist(fx3, fy3, self.lpips_lin_row, s, tile_s)   # [B]

    # --- forward -------------------------------------------------------------
    def forward(self, codebook_loss, loss_break, inputs, reconstructions,
                optimizer_idx, global_step, cls_loss=None, last_layer=None,
                cond=None, split="train"):
        # NCHW (PyTorch API) -> NHWC once at the boundary; channel-last inside.
        x_nhwc = jnp.transpose(inputs, (0, 2, 3, 1)).astype(jnp.float32)
        y_nhwc = jnp.transpose(reconstructions, (0, 2, 3, 1)).astype(jnp.float32)

        rec_sum = pallas_abs_diff_sum(x_nhwc, y_nhwc)
        rec_mean = rec_sum / inputs.size

        if self.perceptual_weight > 0:
            p_mean = jnp.mean(self.perceptual_loss_per_sample(x_nhwc, y_nhwc))
        else:
            p_mean = jnp.float32(0.0)
        # mean(rec + w*broadcast(p)) == mean(rec) + w*mean(p)
        nll_loss = rec_mean + self.perceptual_weight * p_mean

        if optimizer_idx == 0:
            assert cond is None and not self.disc_conditional
            logits_fake = self.discriminator(y_nhwc)
            g_loss = pallas_non_sat_gen_loss(logits_fake)

            # TODO(synk): adaptive d_weight needs autograd of nll/g_loss w.r.t.
            # the decoder's last layer (graph not available here); using the
            # fixed gen_loss_weight path of the reference module instead.
            d_weight = jnp.asarray(
                self.gen_loss_weight if self.gen_loss_weight is not None else 0.0,
                jnp.float32)

            disc_factor = adopt_weight(self.disc_factor, global_step,
                                       threshold=self.discriminator_iter_start)
            g_loss_scaled = d_weight * disc_factor * g_loss

            scale_codebook_loss = self.codebook_weight * codebook_loss
            if self.codebook_enlarge_ratio > 0:
                scale_codebook_loss = (self.codebook_enlarge_ratio *
                                       max(0, 1 - global_step / self.codebook_enlarge_steps) *
                                       scale_codebook_loss + scale_codebook_loss)

            loss = (nll_loss + g_loss_scaled + scale_codebook_loss +
                    loss_break.commitment * self.commit_weight)
            if cls_loss is not None and self.cls_loss_weight:
                loss = loss + cls_loss * self.cls_loss_weight

            log = {
                f"{split}/total_loss": loss,
                f"{split}/per_sample_entropy": loss_break.per_sample_entropy,
                f"{split}/codebook_entropy": loss_break.codebook_entropy,
                f"{split}/commit_loss": loss_break.commitment,
                f"{split}/entropy_loss": codebook_loss,
                f"{split}/nll_loss": nll_loss,
                f"{split}/reconstruct_loss": rec_mean,
                f"{split}/perceptual_loss": p_mean,
                f"{split}/d_weight": d_weight,
                f"{split}/disc_factor": jnp.asarray(disc_factor, jnp.float32),
                f"{split}/g_loss": g_loss_scaled,
            }
            return loss, log

        if optimizer_idx == 1:
            assert cond is None
            # TODO(synk): batch-concat single D pass skipped on purpose —
            # training-mode BatchNorm stats would mix real/fake batches and
            # change the reference semantics of two separate D calls.
            logits_real = self.discriminator(jax.lax.stop_gradient(x_nhwc))
            logits_fake = self.discriminator(jax.lax.stop_gradient(y_nhwc))
            disc_factor = adopt_weight(self.disc_factor, global_step,
                                       threshold=self.discriminator_iter_start)
            # TODO(synk): lecam regularizer path skipped (lecam_loss_weight=None default).
            d_loss_core = pallas_hinge_d_loss(logits_real, logits_fake)
            d_loss = disc_factor * d_loss_core
            log = {
                f"{split}/disc_loss": d_loss,
                f"{split}/logits_real": jnp.mean(logits_real),
                f"{split}/logits_fake": jnp.mean(logits_fake),
                f"{split}/disc_factor": jnp.asarray(disc_factor, jnp.float32),
                f"{split}/non_saturated_d_loss": d_loss_core,
            }
            return d_loss, log


# ----------------------------------------------------------------------------
if __name__ == "__main__":
    key = jax.random.PRNGKey(0)
    k_in, k_rec, k_cb, k_mod = jax.random.split(key, 4)

    B, C, H, W = 2, 3, 16, 16
    inputs = jax.random.normal(k_in, (B, C, H, W), jnp.float32)
    reconstructions = jax.random.normal(k_rec, (B, C, H, W), jnp.float32)
    codebook_loss = jnp.abs(jax.random.normal(k_cb, (), jnp.float32))
    loss_break = LossBreak(commitment=jnp.float32(0.1),
                           per_sample_entropy=jnp.float32(2.3),
                           codebook_entropy=jnp.float32(4.1))

    module = VQLPIPSWithDiscriminatorPallas(
        key=k_mod, disc_start=0, disc_dim=32, disc_num_layers=2,
        disc_in_channels=3, gen_loss_weight=0.1)

    gen_loss, gen_log = module.forward(codebook_loss, loss_break, inputs,
                                       reconstructions, optimizer_idx=0,
                                       global_step=100)
    disc_loss, disc_log = module.forward(codebook_loss, loss_break, inputs,
                                         reconstructions, optimizer_idx=1,
                                         global_step=100)

    jax.block_until_ready(gen_loss)
    jax.block_until_ready(disc_loss)
    print("KERNEL_OK")
</pallas_src>

<mosaic_0001>
module attributes {stable_mosaic.version = 11 : i64} {
  func.func @_abs_diff_partial_kernel(%arg0: i32, %arg1: memref<16x128xf32, #tpu.memory_space<vmem>>, %arg2: memref<16x128xf32, #tpu.memory_space<vmem>>, %arg3: memref<1x8x128xf32, #tpu.memory_space<vmem>>) attributes {dimension_semantics = [#tpu.dimension_semantics<parallel>], iteration_bounds = array<i64: 1>, scalar_prefetch = 0 : i64, scratch_operands = 0 : i64, tpu.core_type = #tpu.core_type<tc>, window_params = [{transform_indices = @transform_0, window_bounds = array<i64: 16, 128>}, {transform_indices = @transform_1, window_bounds = array<i64: 16, 128>}, {transform_indices = @transform_2, window_bounds = array<i64: 1, 8, 128>}]} {
    %c0 = arith.constant 0 : index
    %c0_0 = arith.constant 0 : index
    %0 = vector.load %arg1[%c0, %c0_0] : memref<16x128xf32, #tpu.memory_space<vmem>>, vector<16x128xf32>
    %c0_1 = arith.constant 0 : index
    %c0_2 = arith.constant 0 : index
    %1 = vector.load %arg2[%c0_1, %c0_2] : memref<16x128xf32, #tpu.memory_space<vmem>>, vector<16x128xf32>
    %2 = arith.subf %0, %1 : vector<16x128xf32>
    %3 = math.absf %2 : vector<16x128xf32>
    %4 = vector.shape_cast %3 : vector<16x128xf32> to vector<2x8x128xf32>
    %cst = arith.constant dense<0.000000e+00> : vector<8x128xf32>
    %5 = vector.multi_reduction <add>, %4, %cst [0] : vector<2x8x128xf32> to vector<8x128xf32>
    %6 = vector.shape_cast %5 : vector<8x128xf32> to vector<1x8x128xf32>
    %c0_3 = arith.constant 0 : index
    %c0_4 = arith.constant 0 : index
    %c0_5 = arith.constant 0 : index
    %7 = vector.load %arg3[%c0_3, %c0_4, %c0_5] : memref<1x8x128xf32, #tpu.memory_space<vmem>>, vector<1x8x128xf32>
    tpu.vector_store %arg3[%c0_3, %c0_4, %c0_5], %6 {strides = array<i32>} : memref<1x8x128xf32, #tpu.memory_space<vmem>>, vector<1x8x128xf32>,
    return
  }
  func.func @transform_0(%arg0: i32) -> (i32, i32) {
    %c0_i32 = arith.constant 0 : i32
    %c0_i32_0 = arith.constant 0 : i32
    return %arg0, %c0_i32 : i32, i32
  }
  func.func @transform_1(%arg0: i32) -> (i32, i32) {
    %c0_i32 = arith.constant 0 : i32
    %c0_i32_0 = arith.constant 0 : i32
    return %arg0, %c0_i32 : i32, i32
  }
  func.func @transform_2(%arg0: i32) -> (i32, i32, i32) {
    %c0_i32 = arith.constant 0 : i32
    %c0_i32_0 = arith.constant 0 : i32
    %c0_i32_1 = arith.constant 0 : i32
    return %arg0, %c0_i32, %c0_i32_0 : i32, i32, i32
  }
}

</mosaic_0001>

<llo_original>
// kernel: tpu_custom_call.1
$region0: #{tpu_custom_call.1}
  #allocation0 [shape = 'u32[]', space=smem, size = 0x4, offset = 0x4, fixed_abs, tag = 'smem constant byte address 0x4 - core index']
  #allocation1 [shape = 'u32[72,128]{1,0:T(1,128)}', space=vmem, size = 0x9000, scoped, tag = 'internal scratch']
  %s0 = inlined_call_operand.hbm [shape: f32[16,128], index: 0, kind: input, shape index: {}]
  %s1 = inlined_call_operand.hbm [shape: f32[16,128], index: 1, kind: input, shape index: {}]
  %s2 = inlined_call_operand.hbm [shape: f32[1,8,128], index: 2, kind: output, shape index: {}]
  %s3 = sld [smem:[#allocation0]]
  $region26: #{tpu_custom_call.1} parent=0
    _
  %s5 = ssub.s32 1, %s3
  %s6 = scalar_select 0, %s5, %s3
  $region1: #{tpu_custom_call.1} parent=0
    #allocation2 [shape = 'u8[8192]{0}', space=vmem, size = 0x2000, scoped, tag = 'input window, operand 0, single buffered']
    #allocation3 [shape = 's32[1]{0}', space=sflag, size = 0x4, scoped, tag = 'scoped memory for tpu_custom_call.1']
    #allocation4 [shape = 's32[1]{0}', space=sflag, size = 0x4, scoped, tag = 'scoped memory for tpu_custom_call.1']
    #allocation5 [shape = 'u8[8192]{0}', space=vmem, size = 0x2000, scoped, tag = 'input window, operand 1, single buffered']
    #allocation6 [shape = 's32[1]{0}', space=sflag, size = 0x4, scoped, tag = 'scoped memory for tpu_custom_call.1']
    #allocation7 [shape = 'u8[4096]{0}', space=vmem, size = 0x1000, scoped, tag = 'output window, operand 0, single buffered']
    %7 = vsyncpa [#allocation3], 0
    %8 = vsyncpa [#allocation6], 0
    %9 = vsyncpa [#allocation4], 0
    // Predicated region
    $region2: #{tpu_custom_call.1} parent=1 // pred_check
      _
    $region3: #{tpu_custom_call.1} parent=1 // pred_check_branch
      %11 = sbr.rel (0) target = $region5
    $region4: #{tpu_custom_call.1} parent=1 // pred_region
      %13 = vsyncadd [#allocation3], 0
      %s14 = sshll.u32 %s0, 4
      %s15 = int_to_ptr.hbm [resolvable:$true] %s14
      %s16 = sshll.u32 [#allocation2], 4
      %s17 = int_to_ptr.vmem [resolvable:$true] %s16
      %22 = dma.hbm_to_vmem [thread:$0]  %s15, 256, %s17, [#allocation3], 128, 128, 8
    $region5: #{tpu_custom_call.1} parent=1 // pred_fallthru
      _
    // Predicated region
    $region6: #{tpu_custom_call.1} parent=1 // pred_check
      _
    $region7: #{tpu_custom_call.1} parent=1 // pred_check_branch
      %24 = sbr.rel (0) target = $region9
    $region8: #{tpu_custom_call.1} parent=1 // pred_region
      %26 = vsyncadd [#allocation6], 0
      %s27 = sshll.u32 %s1, 4
      %s28 = int_to_ptr.hbm [resolvable:$true] %s27
      %s29 = sshll.u32 [#allocation5], 4
      %s30 = int_to_ptr.vmem [resolvable:$true] %s29
      %35 = dma.hbm_to_vmem [thread:$0]  %s28, 256, %s30, [#allocation6], 128, 128, 8
    $region9: #{tpu_custom_call.1} parent=1 // pred_fallthru
      _
    // Predicated region
    $region10: #{tpu_custom_call.1} parent=1 // pred_check
      _
    $region11: #{tpu_custom_call.1} parent=1 // pred_check_branch
      %37 = sbr.rel (0) target = $region13
    $region12: #{tpu_custom_call.1} parent=1 // pred_region
      %39 = dma.done [#allocation3], 256
    $region13: #{tpu_custom_call.1} parent=1 // pred_fallthru
      _
    // Predicated region
    $region14: #{tpu_custom_call.1} parent=1 // pred_check
      _
    $region15: #{tpu_custom_call.1} parent=1 // pred_check_branch
      %41 = sbr.rel (0) target = $region17
    $region16: #{tpu_custom_call.1} parent=1 // pred_region
      %43 = dma.done [#allocation6], 256
    $region17: #{tpu_custom_call.1} parent=1 // pred_fallthru
      _
    %v44 = vld [vmem:[#allocation2] sm:$0xff]
    %v45 = vld [vmem:[#allocation2 + $0x8] sm:$0xff]
    %v46 = vld [vmem:[#allocation5] sm:$0xff]
    %v47 = vld [vmem:[#allocation5 + $0x8] sm:$0xff]
    %v48 = vsub.f32 %v44, %v46
    %v49 = vsub.f32 %v45, %v47
    %v50 = vand.u32 2147483647, %v48
    %v51 = vand.u32 2147483647, %v49
    %v52 = vadd.f32 %v50, %v51
    %53 = vst [vmem:[#allocation7] sm:$0xff] %v52
    // Predicated region
    $region18: #{tpu_custom_call.1} parent=1 // pred_check
      _
    $region19: #{tpu_custom_call.1} parent=1 // pred_check_branch
      %55 = sbr.rel (0) target = $region21
    $region20: #{tpu_custom_call.1} parent=1 // pred_region
      %57 = vsyncadd [#allocation4], 0
      %s59 = sshll.u32 [#allocation7], 4
      %s60 = int_to_ptr.vmem [resolvable:$true] %s59
      %s61 = sshll.u32 %s2, 4
      %s62 = int_to_ptr.hbm [resolvable:$true] %s61
      %64 = dma.vmem_to_hbm [thread:$0]  %s60, 128, %s62, [#allocation4]
    $region21: #{tpu_custom_call.1} parent=1 // pred_fallthru
      _
    // Predicated region
    $region22: #{tpu_custom_call.1} parent=1 // pred_check
      _
    $region23: #{tpu_custom_call.1} parent=1 // pred_check_branch
      %66 = sbr.rel (0) target = $region25
    $region24: #{tpu_custom_call.1} parent=1 // pred_region
      %68 = dma.done [#allocation4], 128
    $region25: #{tpu_custom_call.1} parent=1 // pred_fallthru
      _
    %69 = vsyncpa [#allocation3], 1
    %70 = vsyncpa [#allocation6], 1
    %71 = vsyncpa [#allocation4], 1

</llo_original>
